<compile_context>
chip_gen: v7x
topology: tpu7x:2x2x1
jax: 0.10.0
libtpu: 0.0.40
codegen_flags: <defaults>
</compile_context>

<pallas_src>
import jax
import jax.numpy as jnp
from jax.experimental import pallas as pl
from jax.experimental.pallas import tpu as pltpu

OMEGA_0 = 30.0


def _round_up(a, m):
    return (a + m - 1) // m * m


def _blockdiag2(w):
    """[[w, 0], [0, w]] — lets the MXU process two packed batch rows at once."""
    k, n = w.shape
    z = jnp.zeros((k, n), w.dtype)
    return jnp.concatenate(
        [jnp.concatenate([w, z], axis=1),
         jnp.concatenate([z, w], axis=1)], axis=0)             # (2k, 2n)


# ----------------------------- kernels ------------------------------------- #

def resblock_kernel_fused(x_ref, wa_ref, ba_ref, wsel_ref, bb_ref, o_ref):
    """in_features != out_features path (pair-packed, lane-dense output).

    x_ref   : [tb/2, 2*in_f]           (two batch rows per lane row)
    wa_ref  : [2*in_f, 4*out_f]        blockdiag(concat([W1^T, Wt^T]) * omega)
    wsel_ref: [4*out_f, 4*out_f]       [blockdiag([[W2^T*omega],[0]]) | blockdiag([[0],[0.5*I]])]
    o_ref   : [tb/2, 2*out_f]          (128 lanes at out_f=64 -> unmasked stores)
    """
    nh = bb_ref.shape[-1]                                      # 2*out_f
    x = x_ref[...]
    z1 = jnp.dot(x.astype(wa_ref.dtype), wa_ref[...],
                 preferred_element_type=jnp.float32) + ba_ref[...]
    s = jnp.sin(z1)                                            # [h1 | xt] x 2 rows
    t = jnp.dot(s.astype(wsel_ref.dtype), wsel_ref[...],
                preferred_element_type=jnp.float32)
    z2 = t[:, :nh] + bb_ref[...]                               # vreg-aligned slice
    half_xt = t[:, nh:]                                        # 0.5 * xt (selector matmul)
    o_ref[...] = 0.5 * jnp.sin(z2) + half_xt


def resblock_kernel_identity(x_ref, wa_ref, ba_ref, wb_ref, bb_ref, o_ref):
    """in_features == out_features path: residual is the raw input (kept f32)."""
    xf = x_ref[...]                                            # f32 residual
    z1 = jnp.dot(xf.astype(wa_ref.dtype), wa_ref[...],
                 preferred_element_type=jnp.float32) + ba_ref[...]
    s = jnp.sin(z1)
    z2 = jnp.dot(s.astype(wb_ref.dtype), wb_ref[...],
                 preferred_element_type=jnp.float32) + bb_ref[...]
    o_ref[...] = 0.5 * (jnp.sin(z2) + xf)


# ----------------------------- wrapper -------------------------------------- #

def _default_vmem_budget_bytes():
    # Tile-sizing budget (not a hard limit): ~3/8 of physical VMEM, capped at
    # 24 MiB so a config tuned on v5e/v6e (128 MiB) stays safe on v7x (64 MiB).
    try:
        cap = pltpu.get_tpu_info().vmem_capacity_bytes
    except Exception:
        cap = 64 * 1024 * 1024
    return int(min(24 * 1024 * 1024, max(8 * 1024 * 1024, (cap * 3) // 8)))


def resblock_forward(x, w1, b1, w2, b2, wt=None, bt=None, *, tb=None,
                     omega_0=OMEGA_0, matmul_dtype=jnp.float32,
                     vmem_budget_bytes=None):
    """ResBlock forward.

    x : [B, in_features] f32
    w1: [out, in], w2: [out, out], wt: [out, in] (PyTorch layout); b*: [out]
    matmul_dtype: jnp.float32 (tight numerics) or jnp.bfloat16 for the MXU
      operands / x stream (accumulation, sin and the residual stay f32).
      Note omega_0 is folded into the weights *before* the bf16 cast.
    """
    B, in_f = x.shape
    out_f = w1.shape[0]
    flag = in_f != out_f                       # same condition as ResBlock.flag
    if flag and (wt is None or bt is None):
        raise ValueError("in_features != out_features requires transform weights (wt, bt)")

    f32 = jnp.float32

    # ---- fold omega_0 into pre-transposed, pair-packed (loop-invariant) weights ----
    if flag:
        w_x = jnp.concatenate([w1.T, wt.T], axis=1) * omega_0           # [in, 2*out]
        b_x = jnp.concatenate([b1, bt]) * omega_0                       # [2*out]
        w2_pad = jnp.concatenate([w2.T * omega_0,
                                  jnp.zeros((out_f, out_f), f32)], axis=0)   # [2*out, out]
        sel = jnp.concatenate([jnp.zeros((out_f, out_f), f32),
                               0.5 * jnp.eye(out_f, dtype=f32)], axis=0)     # [2*out, out]
        wa = _blockdiag2(w_x).astype(matmul_dtype)                      # [2*in, 4*out]
        ba = jnp.tile(b_x, 2)[None, :].astype(f32)                      # [1, 4*out]
        w_stage2 = jnp.concatenate(
            [_blockdiag2(w2_pad), _blockdiag2(sel)], axis=1).astype(matmul_dtype)  # [4*out, 4*out]
        bb = jnp.tile(b2 * omega_0, 2)[None, :].astype(f32)             # [1, 2*out]
        kernel = resblock_kernel_fused
        x_stream = x.astype(matmul_dtype)       # halves the dominant HBM stream in bf16
    else:
        wa = _blockdiag2(w1.T * omega_0).astype(matmul_dtype)           # [2*in, 2*out]
        ba = jnp.tile(b1 * omega_0, 2)[None, :].astype(f32)
        w_stage2 = _blockdiag2(w2.T * omega_0).astype(matmul_dtype)     # [2*out, 2*out]
        bb = jnp.tile(b2 * omega_0, 2)[None, :].astype(f32)
        kernel = resblock_kernel_identity
        x_stream = x.astype(f32)                # residual stays f32; cast in-kernel for MXU

    x_cols = 2 * in_f                            # packed x width
    out_cols = 2 * out_f                         # packed output width (lane dense at out_f=64)
    s1n = wa.shape[1]
    s2n = w_stage2.shape[1]
    itemsize_mm = jnp.dtype(matmul_dtype).itemsize
    x_itemsize = jnp.dtype(x_stream.dtype).itemsize

    # ---- batch tile selection (rows of the ORIGINAL batch, multiple of 32) ----
    if vmem_budget_bytes is None:
        vmem_budget_bytes = _default_vmem_budget_bytes()
    if tb is None:
        tb = 4096                                # big tiles amortize the ~600-cyc/step cost
    tb = max(32, _round_up(int(tb), 32))

    rows_rounded = _round_up(B, 32)
    tb = min(tb, rows_rounded)
    # >= 2 grid blocks so both v7x TensorCores get work (and the pipeline has
    # something to overlap); costs nothing on 1-TC v5e/v6e.
    if rows_rounded >= 64:
        tb = min(tb, _round_up(pl.cdiv(rows_rounded, 2), 32))

    # Conservative VMEM estimate per packed row: double-buffered x/out tiles,
    # f32 intermediates (with slack) and the cast operand for the 2nd matmul.
    per_packed_row = (2 * x_cols * x_itemsize
                      + 2 * out_cols * 4
                      + (s1n + s2n) * (2 * 4 + itemsize_mm))
    fixed_bytes = 2 * ((wa.size + w_stage2.size) * itemsize_mm
                       + (ba.size + bb.size) * 4)
    tb2_cap = max(16, ((vmem_budget_bytes - fixed_bytes) // per_packed_row) // 16 * 16)
    tb = min(tb, 2 * int(tb2_cap))
    tb = max(32, tb)
    tb2 = tb // 2

    # ---- pad the batch so the grid covers it exactly, then pair-pack ----
    n_blocks = pl.cdiv(B, tb)
    b_pad = n_blocks * tb
    if b_pad != B:
        x_stream = jnp.pad(x_stream, ((0, b_pad - B), (0, 0)))
    x_packed = x_stream.reshape(b_pad // 2, x_cols)

    out_packed = pl.pallas_call(
        kernel,
        out_shape=jax.ShapeDtypeStruct((b_pad // 2, out_cols), f32),
        grid_spec=pltpu.PrefetchScalarGridSpec(
            num_scalar_prefetch=0,
            grid=(n_blocks,),
            in_specs=[
                pl.BlockSpec((tb2, x_cols), lambda i: (i, 0)),   # x tile (streamed)
                pl.BlockSpec(wa.shape, lambda i: (0, 0)),        # stage-1 weights (fetched once)
                pl.BlockSpec(ba.shape, lambda i: (0, 0)),
                pl.BlockSpec(w_stage2.shape, lambda i: (0, 0)),  # stage-2 weights (+ selector)
                pl.BlockSpec(bb.shape, lambda i: (0, 0)),
            ],
            out_specs=pl.BlockSpec((tb2, out_cols), lambda i: (i, 0)),
        ),
        compiler_params=pltpu.CompilerParams(
            dimension_semantics=("parallel",),
            vmem_limit_bytes=32 * 1024 * 1024),
    )(x_packed, wa, ba, w_stage2, bb)

    # Un-pack (free row-major reinterpretation) and drop padded rows.
    out = out_packed.reshape(b_pad, out_f)
    return out[:B] if b_pad != B else out


# ----------------------------- helpers / reference --------------------------- #

def init_sine_layer(key, in_features, out_features, omega_0=OMEGA_0, is_first=False):
    """Deterministic SIREN init matching SineLayer.init_weights + nn.Linear bias init."""
    kw, kb = jax.random.split(key)
    if is_first:
        bound_w = 1.0 / in_features
    else:
        bound_w = jnp.sqrt(6.0 / in_features) / omega_0
    w = jax.random.uniform(kw, (out_features, in_features),
                           minval=-bound_w, maxval=bound_w, dtype=jnp.float32)
    bound_b = 1.0 / jnp.sqrt(in_features)
    b = jax.random.uniform(kb, (out_features,),
                           minval=-bound_b, maxval=bound_b, dtype=jnp.float32)
    return w, b


def resblock_reference(x, w1, b1, w2, b2, wt=None, bt=None, omega_0=OMEGA_0):
    hp = jax.lax.Precision.HIGHEST
    h1 = jnp.sin(omega_0 * (jnp.dot(x, w1.T, precision=hp) + b1))
    h2 = jnp.sin(omega_0 * (jnp.dot(h1, w2.T, precision=hp) + b2))
    res = jnp.sin(omega_0 * (jnp.dot(x, wt.T, precision=hp) + bt)) if wt is not None else x
    return 0.5 * (h2 + res)


if __name__ == "__main__":
    key = jax.random.PRNGKey(0)
    k_x, k1, k2, k3 = jax.random.split(key, 4)

    batch = 100          # not a multiple of the tile -> exercises padding + 2-block rule
    in_features = 32
    out_features = 64    # in != out -> transform branch active (self.flag == True)

    x = jax.random.normal(k_x, (batch, in_features), dtype=jnp.float32)
    w1, b1 = init_sine_layer(k1, in_features, out_features)
    w2, b2 = init_sine_layer(k2, out_features, out_features)
    wt, bt = init_sine_layer(k3, in_features, out_features)

    ref = resblock_reference(x, w1, b1, w2, b2, wt, bt)

    # 1) f32 MXU path, explicit small tile -> multi-step pipelined grid.
    out = resblock_forward(x, w1, b1, w2, b2, wt, bt, tb=32)
    out = jax.block_until_ready(out)
    assert out.shape == (batch, out_features)
    assert jnp.allclose(out, ref, atol=1e-3, rtol=1e-3), "f32 kernel mismatch vs reference"

    # 1b) default (auto) tile selection.
    out_auto = resblock_forward(x, w1, b1, w2, b2, wt, bt)
    out_auto = jax.block_until_ready(out_auto)
    assert jnp.allclose(out_auto, ref, atol=1e-3, rtol=1e-3), "auto-tile kernel mismatch"

    # 2) bf16 MXU operands / x stream (valid on v5e/v6e/v7x; accumulation,
    #    sin and the residual stay f32).  sin(30*x) amplifies rounding error,
    #    so only a loose check here.
    out_bf16 = resblock_forward(x, w1, b1, w2, b2, wt, bt, tb=64,
                                matmul_dtype=jnp.bfloat16)
    out_bf16 = jax.block_until_ready(out_bf16)
    assert out_bf16.shape == (batch, out_features)
    assert float(jnp.max(jnp.abs(out_bf16 - ref))) < 0.2, "bf16 kernel drifted too far"

    # 3) in_features == out_features path (identity residual, no transform layer).
    x2 = jax.random.normal(k_x, (batch, out_features), dtype=jnp.float32)
    w1s, b1s = init_sine_layer(k1, out_features, out_features)
    out_id = resblock_forward(x2, w1s, b1s, w2, b2, tb=64)
    out_id = jax.block_until_ready(out_id)
    ref_id = resblock_reference(x2, w1s, b1s, w2, b2)
    assert jnp.allclose(out_id, ref_id, atol=1e-3, rtol=1e-3), "identity-path mismatch"

    print("KERNEL_OK")
</pallas_src>

<mosaic_0001>
module attributes {stable_mosaic.version = 11 : i64} {
  func.func @resblock_kernel_fused(%arg0: i32, %arg1: memref<16x64xf32, #tpu.memory_space<vmem>>, %arg2: memref<64x256xf32, #tpu.memory_space<vmem>>, %arg3: memref<1x256xf32, #tpu.memory_space<vmem>>, %arg4: memref<256x256xf32, #tpu.memory_space<vmem>>, %arg5: memref<1x128xf32, #tpu.memory_space<vmem>>, %arg6: memref<16x128xf32, #tpu.memory_space<vmem>>) attributes {dimension_semantics = [#tpu.dimension_semantics<parallel>], iteration_bounds = array<i64: 4>, scalar_prefetch = 0 : i64, scratch_operands = 0 : i64, tpu.core_type = #tpu.core_type<tc>, window_params = [{transform_indices = @transform_0, window_bounds = array<i64: 16, 64>}, {pipeline_mode = #tpu.pipeline_mode<synchronous>, transform_indices = @transform_1, window_bounds = array<i64: 64, 256>}, {pipeline_mode = #tpu.pipeline_mode<synchronous>, transform_indices = @transform_2, window_bounds = array<i64: 1, 256>}, {pipeline_mode = #tpu.pipeline_mode<synchronous>, transform_indices = @transform_3, window_bounds = array<i64: 256, 256>}, {pipeline_mode = #tpu.pipeline_mode<synchronous>, transform_indices = @transform_4, window_bounds = array<i64: 1, 128>}, {transform_indices = @transform_5, window_bounds = array<i64: 16, 128>}]} {
    %c0 = arith.constant 0 : index
    %c0_0 = arith.constant 0 : index
    %0 = vector.load %arg1[%c0, %c0_0] : memref<16x64xf32, #tpu.memory_space<vmem>>, vector<16x64xf32>
    %c0_1 = arith.constant 0 : index
    %c0_2 = arith.constant 0 : index
    %1 = vector.load %arg2[%c0_1, %c0_2] : memref<64x256xf32, #tpu.memory_space<vmem>>, vector<64x256xf32>
    %cst = arith.constant dense<0.000000e+00> : vector<16x256xf32>
    %2 = tpu.matmul %0, %1, %cst {dimension_numbers = #tpu.dot_dimension_numbers<[1], [0], [0], [1], [0, 0, 1, 1], [], []>} : vector<16x64xf32>, vector<64x256xf32>, vector<16x256xf32> -> vector<16x256xf32>
    %c0_3 = arith.constant 0 : index
    %c0_4 = arith.constant 0 : index
    %3 = vector.load %arg3[%c0_3, %c0_4] : memref<1x256xf32, #tpu.memory_space<vmem>>, vector<1x256xf32>
    %4 = vector.broadcast %3 : vector<1x256xf32> to vector<16x256xf32>
    %5 = arith.addf %2, %4 : vector<16x256xf32>
    %6 = math.sin %5 : vector<16x256xf32>
    %c0_5 = arith.constant 0 : index
    %c0_6 = arith.constant 0 : index
    %7 = vector.load %arg4[%c0_5, %c0_6] : memref<256x256xf32, #tpu.memory_space<vmem>>, vector<256x256xf32>
    %cst_7 = arith.constant dense<0.000000e+00> : vector<16x256xf32>
    %8 = tpu.matmul %6, %7, %cst_7 {dimension_numbers = #tpu.dot_dimension_numbers<[1], [0], [0], [1], [0, 0, 1, 1], [], []>} : vector<16x256xf32>, vector<256x256xf32>, vector<16x256xf32> -> vector<16x256xf32>
    %9 = vector.extract_strided_slice %8 {offsets = [0, 0], sizes = [16, 128], strides = [1, 1]} : vector<16x256xf32> to vector<16x128xf32>
    %c0_8 = arith.constant 0 : index
    %c0_9 = arith.constant 0 : index
    %10 = vector.load %arg5[%c0_8, %c0_9] : memref<1x128xf32, #tpu.memory_space<vmem>>, vector<1x128xf32>
    %11 = vector.broadcast %10 : vector<1x128xf32> to vector<16x128xf32>
    %12 = arith.addf %9, %11 : vector<16x128xf32>
    %13 = vector.extract_strided_slice %8 {offsets = [0, 128], sizes = [16, 128], strides = [1, 1]} : vector<16x256xf32> to vector<16x128xf32>
    %14 = math.sin %12 : vector<16x128xf32>
    %cst_10 = arith.constant 5.000000e-01 : f32
    %15 = vector.broadcast %cst_10 : f32 to vector<16x128xf32>
    %16 = arith.mulf %15, %14 : vector<16x128xf32>
    %17 = arith.addf %16, %13 : vector<16x128xf32>
    %c0_11 = arith.constant 0 : index
    %c0_12 = arith.constant 0 : index
    %18 = vector.load %arg6[%c0_11, %c0_12] : memref<16x128xf32, #tpu.memory_space<vmem>>, vector<16x128xf32>
    tpu.vector_store %arg6[%c0_11, %c0_12], %17 {strides = array<i32>} : memref<16x128xf32, #tpu.memory_space<vmem>>, vector<16x128xf32>,
    return
  }
  func.func @transform_0(%arg0: i32) -> (i32, i32) {
    %c0_i32 = arith.constant 0 : i32
    %c0_i32_0 = arith.constant 0 : i32
    return %arg0, %c0_i32 : i32, i32
  }
  func.func @transform_1(%arg0: i32) -> (i32, i32) {
    %c0_i32 = arith.constant 0 : i32
    %c0_i32_0 = arith.constant 0 : i32
    %c0_i32_1 = arith.constant 0 : i32
    return %c0_i32, %c0_i32_0 : i32, i32
  }
  func.func @transform_2(%arg0: i32) -> (i32, i32) {
    %c0_i32 = arith.constant 0 : i32
    %c0_i32_0 = arith.constant 0 : i32
    %c0_i32_1 = arith.constant 0 : i32
    return %c0_i32, %c0_i32_0 : i32, i32
  }
  func.func @transform_3(%arg0: i32) -> (i32, i32) {
    %c0_i32 = arith.constant 0 : i32
    %c0_i32_0 = arith.constant 0 : i32
    %c0_i32_1 = arith.constant 0 : i32
    return %c0_i32, %c0_i32_0 : i32, i32
  }
  func.func @transform_4(%arg0: i32) -> (i32, i32) {
    %c0_i32 = arith.constant 0 : i32
    %c0_i32_0 = arith.constant 0 : i32
    %c0_i32_1 = arith.constant 0 : i32
    return %c0_i32, %c0_i32_0 : i32, i32
  }
  func.func @transform_5(%arg0: i32) -> (i32, i32) {
    %c0_i32 = arith.constant 0 : i32
    %c0_i32_0 = arith.constant 0 : i32
    return %arg0, %c0_i32 : i32, i32
  }
}

</mosaic_0001>

<llo_original>
// kernel: tpu_custom_call.1
$region0: #{tpu_custom_call.1}
  #allocation0 [shape = 'u32[]', space=smem, size = 0x4, offset = 0x4, fixed_abs, tag = 'smem constant byte address 0x4 - core index']
  #allocation1 [shape = 'u32[144,128]{1,0:T(1,128)}', space=vmem, size = 0x12000, scoped, tag = 'internal scratch']
  %s0 = inlined_call_operand.hbm [shape: f32[64,64], index: 0, kind: input, shape index: {}]
  %s1 = inlined_call_operand.hbm [shape: f32[64,256], index: 1, kind: input, shape index: {}]
  %s2 = inlined_call_operand.vmem [shape: f32[1,256], index: 2, kind: input, shape index: {}]
  %s3 = inlined_call_operand.hbm [shape: f32[256,256], index: 3, kind: input, shape index: {}]
  %s4 = inlined_call_operand.vmem [shape: f32[1,128], index: 4, kind: input, shape index: {}]
  %s5 = inlined_call_operand.hbm [shape: f32[64,128], index: 5, kind: output, shape index: {}]
  %s6 = sld [smem:[#allocation0]]
  $region65: #{tpu_custom_call.1} parent=0
    _
  %s8 = ssub.s32 1, %s6
  %s9 = scalar_select 0, %s8, %s6
  $region1: #{tpu_custom_call.1} parent=0
    #allocation2 [shape = 'u8[16384]{0}', space=vmem, size = 0x4000, scoped, tag = 'input window, operand 0']
    #allocation3 [shape = 's32[2]{0}', space=sflag, size = 0x8, scoped, tag = 'scoped memory for tpu_custom_call.1']
    #allocation4 [shape = 's32[2]{0}', space=sflag, size = 0x8, scoped, tag = 'scoped memory for tpu_custom_call.1']
    #allocation5 [shape = 'u8[65536]{0}', space=vmem, size = 0x10000, scoped, tag = 'input window, operand 1, single buffered']
    #allocation6 [shape = 's32[1]{0}', space=sflag, size = 0x4, scoped, tag = 'scoped memory for tpu_custom_call.1']
    #allocation7 [shape = 'u8[262144]{0}', space=vmem, size = 0x40000, scoped, tag = 'input window, operand 3, single buffered']
    #allocation8 [shape = 'u8[16384]{0}', space=vmem, size = 0x4000, scoped, tag = 'output window, operand 0']
    %10 = vsyncpa [#allocation3], 0
    %s11 = scalar_lea.sflag [#allocation3], 1
    %12 = vsyncpa %s11, 0
    %13 = vsyncpa [#allocation6], 0
    %14 = vsyncpa [#allocation4], 0
    %s15 = scalar_lea.sflag [#allocation4], 1
    %16 = vsyncpa %s15, 0
    loop: start=0, step=1, limit=6
    $region2: #{tpu_custom_call.1} parent=1 // loop_pre_header
      _
    $region3: #{tpu_custom_call.1} parent=1 // loop_header
      %s18 = sphi 0, %s22
      %p19 = scmp.ge.s32.totalorder %s18, 6
      %s28 = sphi 0, %s30
      %s31 = sphi 0, %s28
      %s32 = sphi 0, %s31
      %s48 = sphi 0, %s32
      %s52 = sphi 0, %s52
      %s54 = sphi 0, %s52
      %s55 = sphi 0, %s54
      %s69 = sphi 0, %s55
      %s73 = sphi 0, %s73
      %s75 = sphi 0, %s73
      %s76 = sphi 0, %s75
      %s90 = sphi 0, %s76
      %s94 = sphi 0, %s94
      %s96 = sphi 0, %s94
      %s97 = sphi 0, %s96
      %s111 = sphi 0, %s97
      %s115 = sphi 0, %s115
      %s117 = sphi 0, %s115
      %s118 = sphi 0, %s117
      %s132 = sphi 0, %s118
      %s138 = sphi 0, %s140
      %s141 = sphi 0, %s138
      %s142 = sphi 0, %s141
      %s158 = sphi 0, %s142
    $region4: #{tpu_custom_call.1} parent=1 // loop_header_branch
      %21 = sbr.rel (%p19) target = $region8
    $region5: #{tpu_custom_call.1} parent=1 // loop_body
      %s23 = ssub.s32 %s18, 1
      %s24 = ssub.s32 %s18, 2
      %s25 = sadd.s32 %s18, 1
      %s26 = ssub.s32 %s18, %s25
      %p27 = scmp.eq.s32.totalorder %s26, 0
      %s29 = sadd.s32 %s28, 1
      %s30 = scalar_select %p27, %s28, %s29
      %p33 = pneg %p27
      %p34 = scmp.eq.s32.totalorder %s18, 3
      %p35 = por %p33, %p34
      %p36 = scmp.ne.s32.totalorder %s28, %s31
      %p37 = scmp.eq.s32.totalorder %s18, 0
      %p38 = por %p36, %p37
      %p39 = scmp.ne.s32.totalorder %s28, %s31
      %p40 = scmp.eq.s32.totalorder %s23, 3
      %p41 = por %p39, %p40
      %p42 = scmp.ne.s32.totalorder %s31, %s32
      %p43 = scmp.eq.s32.totalorder %s23, 0
      %p44 = por %p42, %p43
      %p45 = scmp.ne.s32.totalorder %s31, %s32
      %p46 = scmp.eq.s32.totalorder %s24, 3
      %p47 = por %p45, %p46
      %p49 = scmp.ne.s32.totalorder %s32, %s48
      %p50 = scmp.eq.s32.totalorder %s24, 0
      %p51 = por %p49, %p50
      %s53 = sadd.s32 %s52, 1
      %p56 = scmp.eq.s32.totalorder %s18, 3
      %p57 = scmp.ne.s32.totalorder %s52, %s54
      %p58 = scmp.eq.s32.totalorder %s18, 0
      %p59 = por %p57, %p58
      %p60 = scmp.ne.s32.totalorder %s52, %s54
      %p61 = scmp.eq.s32.totalorder %s23, 3
      %p62 = por %p60, %p61
      %p63 = scmp.ne.s32.totalorder %s54, %s55
      %p64 = scmp.eq.s32.totalorder %s23, 0
      %p65 = por %p63, %p64
      %p66 = scmp.ne.s32.totalorder %s54, %s55
      %p67 = scmp.eq.s32.totalorder %s24, 3
      %p68 = por %p66, %p67
      %p70 = scmp.ne.s32.totalorder %s55, %s69
      %p71 = scmp.eq.s32.totalorder %s24, 0
      %p72 = por %p70, %p71
      %s74 = sadd.s32 %s73, 1
      %p77 = scmp.eq.s32.totalorder %s18, 3
      %p78 = scmp.ne.s32.totalorder %s73, %s75
      %p79 = scmp.eq.s32.totalorder %s18, 0
      %p80 = por %p78, %p79
      %p81 = scmp.ne.s32.totalorder %s73, %s75
      %p82 = scmp.eq.s32.totalorder %s23, 3
      %p83 = por %p81, %p82
      %p84 = scmp.ne.s32.totalorder %s75, %s76
      %p85 = scmp.eq.s32.totalorder %s23, 0
      %p86 = por %p84, %p85
      %p87 = scmp.ne.s32.totalorder %s75, %s76
      %p88 = scmp.eq.s32.totalorder %s24, 3
      %p89 = por %p87, %p88
      %p91 = scmp.ne.s32.totalorder %s76, %s90
      %p92 = scmp.eq.s32.totalorder %s24, 0
      %p93 = por %p91, %p92
      %s95 = sadd.s32 %s94, 1
      %p98 = scmp.eq.s32.totalorder %s18, 3
      %p99 = scmp.ne.s32.totalorder %s94, %s96
      %p100 = scmp.eq.s32.totalorder %s18, 0
      %p101 = por %p99, %p100
      %p102 = scmp.ne.s32.totalorder %s94, %s96
      %p103 = scmp.eq.s32.totalorder %s23, 3
      %p104 = por %p102, %p103
      %p105 = scmp.ne.s32.totalorder %s96, %s97
      %p106 = scmp.eq.s32.totalorder %s23, 0
      %p107 = por %p105, %p106
      %p108 = scmp.ne.s32.totalorder %s96, %s97
      %p109 = scmp.eq.s32.totalorder %s24, 3
      %p110 = por %p108, %p109
      %p112 = scmp.ne.s32.totalorder %s97, %s111
      %p113 = scmp.eq.s32.totalorder %s24, 0
      %p114 = por %p112, %p113
      %s116 = sadd.s32 %s115, 1
      %p119 = scmp.eq.s32.totalorder %s18, 3
      %p120 = scmp.ne.s32.totalorder %s115, %s117
      %p121 = scmp.eq.s32.totalorder %s18, 0
      %p122 = por %p120, %p121
      %p123 = scmp.ne.s32.totalorder %s115, %s117
      %p124 = scmp.eq.s32.totalorder %s23, 3
      %p125 = por %p123, %p124
      %p126 = scmp.ne.s32.totalorder %s117, %s118
      %p127 = scmp.eq.s32.totalorder %s23, 0
      %p128 = por %p126, %p127
      %p129 = scmp.ne.s32.totalorder %s117, %s118
      %p130 = scmp.eq.s32.totalorder %s24, 3
      %p131 = por %p129, %p130
      %p133 = scmp.ne.s32.totalorder %s118, %s132
      %p134 = scmp.eq.s32.totalorder %s24, 0
      %p135 = por %p133, %p134
      %s136 = ssub.s32 %s18, %s25
      %p137 = scmp.eq.s32.totalorder %s136, 0
      %s139 = sadd.s32 %s138, 1
      %s140 = scalar_select %p137, %s138, %s139
      %p143 = pneg %p137
      %p144 = scmp.eq.s32.totalorder %s18, 3
      %p145 = por %p143, %p144
      %p146 = scmp.ne.s32.totalorder %s138, %s141
      %p147 = scmp.eq.s32.totalorder %s18, 0
      %p148 = por %p146, %p147
      %p149 = scmp.ne.s32.totalorder %s138, %s141
      %p150 = scmp.eq.s32.totalorder %s23, 3
      %p151 = por %p149, %p150
      %p152 = scmp.ne.s32.totalorder %s141, %s142
      %p153 = scmp.eq.s32.totalorder %s23, 0
      %p154 = por %p152, %p153
      %p155 = scmp.ne.s32.totalorder %s141, %s142
      %p156 = scmp.eq.s32.totalorder %s24, 3
      %p157 = por %p155, %p156
      %p159 = scmp.ne.s32.totalorder %s142, %s158
      %p160 = scmp.eq.s32.totalorder %s24, 0
      %p161 = por %p159, %p160
      %p162 = scmp.le.s32.totalorder 1, %s18
      %p163 = scmp.lt.s32.totalorder %s18, 5
      %p164 = pnand %p162, %p163
      %p165 = pneg %p164
      // Predicated region
      $region9: #{tpu_custom_call.1} parent=5 // pred_check
        _
      $region10: #{tpu_custom_call.1} parent=5 // pred_check_branch
        %167 = sbr.rel (%p164) target = $region12
      $region11: #{tpu_custom_call.1} parent=5 // pred_region
        %s168 = ssub.s32 %s18, 1
        // Predicated region
        $region13: #{tpu_custom_call.1} parent=11 // pred_check
          %p169 = pneg %p65
        $region14: #{tpu_custom_call.1} parent=11 // pred_check_branch
          %171 = sbr.rel (%p169) target = $region16
        $region15: #{tpu_custom_call.1} parent=11 // pred_region
          %s173 = ssub.s32 2048, 2048
          %174 = vsyncadd [#allocation6], %s173
          %s175 = sshll.u32 [#allocation5], 4
          %s176 = int_to_ptr.vmem [resolvable:$true] %s175
          %181 = dma.hbm_to_vmem [thread:$0]  %s1, 2048, %s176, [#allocation6], 256, 256, 16
        $region16: #{tpu_custom_call.1} parent=11 // pred_fallthru
          _
        // Predicated region
        $region17: #{tpu_custom_call.1} parent=11 // pred_check
          %p182 = pneg %p86
        $region18: #{tpu_custom_call.1} parent=11 // pred_check_branch
          %184 = sbr.rel (%p182) target = $region20
        $region19: #{tpu_custom_call.1} parent=11 // pred_region
          _
        $region20: #{tpu_custom_call.1} parent=11 // pred_fallthru
          _
        // Predicated region
        $region21: #{tpu_custom_call.1} parent=11 // pred_check
          %p185 = pneg %p107
        $region22: #{tpu_custom_call.1} parent=11 // pred_check_branch
          %187 = sbr.rel (%p185) target = $region24
        $region23: #{tpu_custom_call.1} parent=11 // pred_region
          %s189 = ssub.s32 8192, 8192
          %190 = vsyncadd [#allocation6], %s189
          %s191 = sshll.u32 [#allocation7], 4
          %s192 = int_to_ptr.vmem [resolvable:$true] %s191
          %197 = dma.hbm_to_vmem [thread:$0]  %s3, 8192, %s192, [#allocation6], 256, 256, 16
        $region24: #{tpu_custom_call.1} parent=11 // pred_fallthru
          _
        // Predicated region
        $region25: #{tpu_custom_call.1} parent=11 // pred_check
          %p198 = pneg %p128
        $region26: #{tpu_custom_call.1} parent=11 // pred_check_branch
          %200 = sbr.rel (%p198) target = $region28
        $region27: #{tpu_custom_call.1} parent=11 // pred_region
          _
        $region28: #{tpu_custom_call.1} parent=11 // pred_fallthru
          _
      $region12: #{tpu_custom_call.1} parent=5 // pred_fallthru
        _
      %p201 = scmp.lt.s32.totalorder %s18, 4
      // Predicated region
      $region29: #{tpu_custom_call.1} parent=5 // pred_check
        %p202 = pneg %p201
      $region30: #{tpu_custom_call.1} parent=5 // pred_check_branch
        %204 = sbr.rel (%p202) target = $region32
      $region31: #{tpu_custom_call.1} parent=5 // pred_region
        // Predicated region
        $region33: #{tpu_custom_call.1} parent=31 // pred_check
          %p205 = pneg %p38
        $region34: #{tpu_custom_call.1} parent=31 // pred_check_branch
          %207 = sbr.rel (%p205) target = $region36
        $region35: #{tpu_custom_call.1} parent=31 // pred_region
          %s208 = sand.u32 %s28, 1
          %s209 = scalar_lea.sflag [#allocation3], %s208
          %s210 = sand.u32 %s28, 1
          %s211 = smul.addr %s210, 16
          %s212 = scalar_lea.vmem [#allocation2], %s211
          %s213 = smul.u32 2, %s18
          %s215 = ssub.s32 256, 256
          %216 = vsyncadd %s209, %s215
          %s217 = smul.addr %s213, 128
          %s218 = scalar_lea.hbm %s0, %s217
          %s219 = sshll.u32 %s212, 4
          %s220 = int_to_ptr.vmem [resolvable:$true] %s219
          %225 = dma.hbm_to_vmem [thread:$0]  %s218, 256, %s220, %s209, 128, 128, 8
        $region36: #{tpu_custom_call.1} parent=31 // pred_fallthru
          _
      $region32: #{tpu_custom_call.1} parent=5 // pred_fallthru
        _
      %p226 = scmp.le.s32.totalorder 1, %s18
      %p227 = scmp.lt.s32.totalorder %s18, 5
      %p228 = pnand %p226, %p227
      %p229 = pneg %p228
      // Predicated region
      $region37: #{tpu_custom_call.1} parent=5 // pred_check
        _
      $region38: #{tpu_custom_call.1} parent=5 // pred_check_branch
        %231 = sbr.rel (%p228) target = $region40
      $region39: #{tpu_custom_call.1} parent=5 // pred_region
        %s232 = ssub.s32 %s18, 1
        %s233 = sand.u32 %s31, 1
        %s234 = scalar_lea.sflag [#allocation3], %s233
        %s235 = sand.u32 %s31, 1
        %s236 = smul.addr %s235, 16
        %s237 = scalar_lea.vmem [#allocation2], %s236
        // Predicated region
        $region41: #{tpu_custom_call.1} parent=39 // pred_check
          %p238 = pneg %p44
        $region42: #{tpu_custom_call.1} parent=39 // pred_check_branch
          %240 = sbr.rel (%p238) target = $region44
        $region43: #{tpu_custom_call.1} parent=39 // pred_region
          %241 = dma.done %s234, 256
        $region44: #{tpu_custom_call.1} parent=39 // pred_fallthru
          _
        // Predicated region
        $region45: #{tpu_custom_call.1} parent=39 // pred_check
          %p242 = pneg %p65
        $region46: #{tpu_custom_call.1} parent=39 // pred_check_branch
          %244 = sbr.rel (%p242) target = $region48
        $region47: #{tpu_custom_call.1} parent=39 // pred_region
          %245 = dma.done [#allocation6], 2048
        $region48: #{tpu_custom_call.1} parent=39 // pred_fallthru
          _
        // Predicated region
        $region49: #{tpu_custom_call.1} parent=39 // pred_check
          %p246 = pneg %p107
        $region50: #{tpu_custom_call.1} parent=39 // pred_check_branch
          %248 = sbr.rel (%p246) target = $region52
        $region51: #{tpu_custom_call.1} parent=39 // pred_region
          %249 = dma.done [#allocation6], 8192
        $region52: #{tpu_custom_call.1} parent=39 // pred_fallthru
          _
        %s250 = sand.u32 %s31, 1
        %s251 = scalar_lea.sflag [#allocation3], %s250
        %s252 = sand.u32 %s31, 1
        %s253 = smul.addr %s252, 16
        %s254 = scalar_lea.vmem [#allocation2], %s253
        %p255 = pneg %p44
        %p256 = pneg %p41
        %p257 = pneg %p65
        %p258 = pneg %p62
        %p259 = pneg %p86
        %p260 = pneg %p83
        %p261 = pneg %p107
        %p262 = pneg %p104
        %p263 = pneg %p128
        %p264 = pneg %p125
        %p265 = pneg %p154
        %p266 = pneg %p151
        %s267 = sand.u32 %s141, 1
        %s268 = scalar_lea.sflag [#allocation4], %s267
        %s269 = sand.u32 %s141, 1
        %s270 = smul.addr %s269, 16
        %s271 = scalar_lea.vmem [#allocation8], %s270
        %s272 = smul.u32 2, %s23
        %s273 = smul.u32 2, %s23
        %v274 = vld [vmem:[%s237] sm:$0xff]
        %v275 = vld [vmem:[%s237 + $0x8] sm:$0xff]
        %v276 = vld [vmem:[#allocation5] sm:$0xff]
        %v277 = vld [vmem:[#allocation5 + $0x8] sm:$0xff]
        %v278 = vld [vmem:[#allocation5 + $0x10] sm:$0xff]
        %v279 = vld [vmem:[#allocation5 + $0x18] sm:$0xff]
        %v280 = vld [vmem:[#allocation5 + $0x20] sm:$0xff]
        %v281 = vld [vmem:[#allocation5 + $0x28] sm:$0xff]
        %v282 = vld [vmem:[#allocation5 + $0x30] sm:$0xff]
        %v283 = vld [vmem:[#allocation5 + $0x38] sm:$0xff]
        %v284 = vld [vmem:[#allocation5 + $0x40] sm:$0xff]
        %v285 = vld [vmem:[#allocation5 + $0x48] sm:$0xff]
        %v286 = vld [vmem:[#allocation5 + $0x50] sm:$0xff]
        %v287 = vld [vmem:[#allocation5 + $0x58] sm:$0xff]
        %v288 = vld [vmem:[#allocation5 + $0x60] sm:$0xff]
        %v289 = vld [vmem:[#allocation5 + $0x68] sm:$0xff]
        %v290 = vld [vmem:[#allocation5 + $0x70] sm:$0xff]
        %v291 = vld [vmem:[#allocation5 + $0x78] sm:$0xff]
        %v292 = vld [vmem:[%s2] sm:$0x3]
        %v294 = vlaneseq
        %v295 = vshrl.u32 %v294, 7
        %v296 = vsub.s32 0, %v295
        %v297 = vrot.slane %v292, %v296
        %v298 = vlaneseq
        %v299 = vshrl.u32 %v298, 7
        %v300 = vsub.s32 1, %v299
        %v301 = vrot.slane %v292, %v300
        %vm304 = vcmask 523264
        %v306 = vsel %vm304, %v274, 0
        %v309 = vsel %vm304, %v275, 0
        %311 = vmatprep.subr.mxu0 %v277
        %312 = vmatpush1.msra.mxu0 %v276
        %313 = vmatprep.subr.mxu0 %v279
        %314 = vmatpush1.msra.mxu0 %v278
        %315 = vmatprep.subr.mxu0 %v281
        %316 = vmatpush1.msra.mxu0 %v280
        %317 = vmatprep.subr.mxu0 %v283
        %318 = vmatpush1.msra.mxu0 %v282
        %319 = vmatprep.subr.mxu0 %v285
        %320 = vmatpush1.msra.mxu0 %v284
        %321 = vmatprep.subr.mxu0 %v287
        %322 = vmatpush1.msra.mxu0 %v286
        %323 = vmatprep.subr.mxu0 %v289
        %324 = vmatpush1.msra.mxu0 %v288
        %325 = vmatprep.subr.mxu0 %v291
        %326 = vmatpush1.msra.mxu0 %v290
        %327 = vmatprep.subr.mxu0 0.0
        %328 = vmatpush1.msra.mxu0 0.0
        %329 = vmatprep.subr.mxu0 0.0
        %330 = vmatpush1.msra.mxu0 0.0
        %331 = vmatprep.subr.mxu0 0.0
        %332 = vmatpush1.msra.mxu0 0.0
        %333 = vmatprep.subr.mxu0 0.0
        %334 = vmatpush1.msra.mxu0 0.0
        %335 = vmatprep.subr.mxu0 0.0
        %336 = vmatpush1.msra.mxu0 0.0
        %337 = vmatprep.subr.mxu0 0.0
        %338 = vmatpush1.msra.mxu0 0.0
        %339 = vmatprep.subr.mxu0 0.0
        %340 = vmatpush1.msra.mxu0 0.0
        %341 = vmatprep.subr.mxu0 0.0
        %342 = vmatpush1.msra.mxu0 0.0
        %343 = vmatprep.subr.mxu0 0.0
        %344 = vmatpush1.msra.mxu0 0.0
        %345 = vmatprep.subr.mxu0 0.0
        %346 = vmatpush1.msra.mxu0 0.0
        %347 = vmatprep.subr.mxu0 0.0
        %348 = vmatpush1.msra.mxu0 0.0
        %349 = vmatprep.subr.mxu0 0.0
        %350 = vmatpush1.msra.mxu0 0.0
        %351 = vmatprep.subr.mxu0 0.0
        %352 = vmatpush1.msra.mxu0 0.0
        %353 = vmatprep.subr.mxu0 0.0
        %354 = vmatpush1.msra.mxu0 0.0
        %355 = vmatprep.subr.mxu0 0.0
        %356 = vmatpush1.msra.mxu0 0.0
        %357 = vmatprep.subr.mxu0 0.0
        %358 = vmatpush1.msra.mxu0 0.0
        %359 = vmatprep.subr.mxu0 0.0
        %360 = vmatpush1.msra.mxu0 0.0
        %361 = vmatprep.subr.mxu0 0.0
        %362 = vmatpush1.msra.mxu0 0.0
        %363 = vmatprep.subr.mxu0 0.0
        %364 = vmatpush1.msra.mxu0 0.0
        %365 = vmatprep.subr.mxu0 0.0
        %366 = vmatpush1.msra.mxu0 0.0
        %367 = vmatprep.subr.mxu0 0.0
        %368 = vmatpush1.msra.mxu0 0.0
        %369 = vmatprep.subr.mxu0 0.0
        %370 = vmatpush1.msra.mxu0 0.0
        %371 = vmatprep.subr.mxu0 0.0
        %372 = vmatpush1.msra.mxu0 0.0
        %373 = vmatprep.subr.mxu0 0.0
        %374 = vmatpush1.msra.mxu0 0.0
        %375 = vmatprep.mubr.f32.mxu0 0.0
        %376 = vmatmul.mubr.f32.gmra.mrb[0].mxu0 %v306
        %v377 = vpop.f32.mrb[0].mxu0
        %v378 = vadd.f32 %v297, %v377
        %v379 = vpop.f32.mrb[0].mxu0
        %v380 = vadd.f32 %v301, %v379
        %381 = vmatprep.mubr.f32.mxu0 0.0
        %382 = vmatmul.mubr.f32.gmra.mrb[0].mxu0 %v309
        %v383 = vpop.f32.mrb[0].mxu0
        %v384 = vadd.f32 %v297, %v383
        %v385 = vpop.f32.mrb[0].mxu0
        %v386 = vadd.f32 %v301, %v385
        %387 = vdwg.mxu0
        %v388 = vand.u32 2147483647, %v378
        %vm389 = vcmp.le.f32.partialorder %v388, 0.7853982
        %vm390 = vcmp.lt.s32.totalorder %v378, 0
        %v391 = vand.u32 %v378, 2139095040
        %v392 = vshrl.u32 %v391, 23
        %v393 = vsub.s32 %v392, 127
        %v394 = vand.u32 2147483647, %v378
        %v395 = vand.u32 %v394, 8388607
        %v396 = vor.u32 %v395, 8388608
        %v397 = vsub.s32 0, %v396
        %v398 = vadd.s32 %v393, 1
        %vm399 = vcmp.gt.s32.totalorder %v398, 0
        %v400 = vsel %vm399, %v398, 0
        %v401 = vshrl.u32 %v400, 5
        %v402 = vand.u32 %v400, 31
        %v403 = vsub.s32 32, %v402
        %v404 = vshrl.u32 683565275, %v403
        %v405 = vshll.u32 683565275, %v402
        %v406 = vshrl.u32 2475754826, %v403
        %v407 = vor.u32 %v405, %v406
        %v408 = vshll.u32 2475754826, %v402
        %v409 = vshrl.u32 2131351028, %v403
        %v410 = vor.u32 %v408, %v409
        %v411 = vshll.u32 2131351028, %v402
        %v412 = vshrl.u32 2102212464, %v403
        %v413 = vor.u32 %v411, %v412
        %v414 = vshll.u32 2102212464, %v402
        %v415 = vshrl.u32 920167782, %v403
        %v416 = vor.u32 %v414, %v415
        %v417 = vshll.u32 920167782, %v402
        %v418 = vshrl.u32 1326507024, %v403
        %v419 = vor.u32 %v417, %v418
        %vm420 = vcmp.lt.s32.totalorder %v401, 1
        %vm421 = vcmp.lt.s32.totalorder %v401, 2
        %vm422 = vcmp.lt.s32.totalorder %v401, 3
        %vm423 = vcmp.lt.s32.totalorder %v401, 4
        %v424 = vsel %vm420, %v404, %v407
        %v425 = vsel %vm423, %v413, 2102212464
        %v426 = vsel %vm422, %v410, %v425
        %v427 = vsel %vm421, %v424, %v426
        %v428 = vsel %vm420, %v407, %v410
        %v429 = vsel %vm423, %v416, 920167782
        %v430 = vsel %vm422, %v413, %v429
        %v431 = vsel %vm421, %v428, %v430
        %v432 = vsel %vm420, %v410, %v413
        %v433 = vsel %vm423, %v419, 1326507024
        %v434 = vsel %vm422, %v416, %v433
        %v435 = vsel %vm421, %v432, %v434
        %v436 = vshll.u32 %v396, 8
        %v437 = vmul.u32.u64.compose %v436, %v435
        %v438 = vextract.low.u32 %v437
        %v439 = vextract.high.u32 %v437
        %v440 = vmul.u32.u64.compose %v436, %v431
        %v441 = vextract.low.u32 %v440
        %v442 = vextract.high.u32 %v440
        %v443 = vmul.u32 %v436, %v427
        %v444 = vadd.s32 %v439, %v441
        %vm445 = vc.u32 %v439, %v441
        %v446 = vadd.s32 %v442, 1
        %v447 = vsel %vm445, %v446, %v442
        %v448 = vadd.s32 %v443, %v447
        %v449 = vadd.s32 %v448, 536870912
        %v450 = vshrl.u32 %v449, 30
        %v451 = vshll.u32 %v450, 30
        %v452 = vsub.s32 %v448, %v451
        %vm453 = vcmp.lt.s32.totalorder %v452, 0
        %v454 = vsub.s32 0, %v452
        %v455 = vsel %vm453, %v454, %v452
        %v456 = vclz %v455
        %v457 = vsub.s32 %v456, 2
        %vm458 = vcmp.gt.s32.totalorder 0, %v457
        %v459 = vsel %vm458, 0, %v457
        %v460 = vsub.s32 32, %v459
        %v461 = vshll.u32 %v452, %v459
        %v462 = vshrl.u32 %v444, %v460
        %v463 = vor.u32 %v461, %v462
        %v464 = vsub.s32 4294967266, %v459
        %v465 = vadd.s32 %v464, 127
        %v466 = vshll.u32 %v465, 23
        %v467 = vor.u32 4788187, %v466
        %v468 = vand.u32 2147483647, %v467
        %v470 = vcvt.s32.f32 %v463
        %v471 = vmul.f32 %v470, %v468
        %v472 = vxor.u32 %v471, 2147483648
        %v473 = vsel %vm390, %v472, %v471
        %v474 = vsub.s32 4, %v450
        %v475 = vsel %vm390, %v474, %v450
        %v476 = vsel %vm389, %v378, %v473
        %v477 = vsel %vm389, 0, %v475
        %v478 = vcosq.f32.pop %v476
        %v479 = vsinq.f32.pop %v476
        %vm480 = vweird.f32 %v378
        %v481 = vadd.s32 %v477, 3
        %v482 = vand.u32 %v481, 3
        %vm483 = vcmp.lt.s32.totalorder %v482, 2
        %vm484 = vcmp.eq.s32.totalorder %v482, 0
        %v485 = vxor.u32 %v479, 2147483648
        %v486 = vsel %vm484, %v478, %v485
        %vm487 = vcmp.eq.s32.totalorder %v482, 2
        %v488 = vxor.u32 %v478, 2147483648
        %v489 = vsel %vm487, %v488, %v479
        %v490 = vsel %vm483, %v486, %v489
        %v491 = vsel %vm480, nan, %v490
        %v492 = vand.u32 2147483647, %v380
        %vm493 = vcmp.le.f32.partialorder %v492, 0.7853982
        %vm494 = vcmp.lt.s32.totalorder %v380, 0
        %v495 = vand.u32 %v380, 2139095040
        %v496 = vshrl.u32 %v495, 23
        %v497 = vsub.s32 %v496, 127
        %v498 = vand.u32 2147483647, %v380
        %v499 = vand.u32 %v498, 8388607
        %v500 = vor.u32 %v499, 8388608
        %v501 = vsub.s32 0, %v500
        %v502 = vadd.s32 %v497, 1
        %vm503 = vcmp.gt.s32.totalorder %v502, 0
        %v504 = vsel %vm503, %v502, 0
        %v505 = vshrl.u32 %v504, 5
        %v506 = vand.u32 %v504, 31
        %v507 = vsub.s32 32, %v506
        %v508 = vshrl.u32 683565275, %v507
        %v509 = vshll.u32 683565275, %v506
        %v510 = vshrl.u32 2475754826, %v507
        %v511 = vor.u32 %v509, %v510
        %v512 = vshll.u32 2475754826, %v506
        %v513 = vshrl.u32 2131351028, %v507
        %v514 = vor.u32 %v512, %v513
        %v515 = vshll.u32 2131351028, %v506
        %v516 = vshrl.u32 2102212464, %v507
        %v517 = vor.u32 %v515, %v516
        %v518 = vshll.u32 2102212464, %v506
        %v519 = vshrl.u32 920167782, %v507
        %v520 = vor.u32 %v518, %v519
        %v521 = vshll.u32 920167782, %v506
        %v522 = vshrl.u32 1326507024, %v507
        %v523 = vor.u32 %v521, %v522
        %vm524 = vcmp.lt.s32.totalorder %v505, 1
        %vm525 = vcmp.lt.s32.totalorder %v505, 2
        %vm526 = vcmp.lt.s32.totalorder %v505, 3
        %vm527 = vcmp.lt.s32.totalorder %v505, 4
        %v528 = vsel %vm524, %v508, %v511
        %v529 = vsel %vm527, %v517, 2102212464
        %v530 = vsel %vm526, %v514, %v529
        %v531 = vsel %vm525, %v528, %v530
        %v532 = vsel %vm524, %v511, %v514
        %v533 = vsel %vm527, %v520, 920167782
        %v534 = vsel %vm526, %v517, %v533
        %v535 = vsel %vm525, %v532, %v534
        %v536 = vsel %vm524, %v514, %v517
        %v537 = vsel %vm527, %v523, 1326507024
        %v538 = vsel %vm526, %v520, %v537
        %v539 = vsel %vm525, %v536, %v538
        %v540 = vshll.u32 %v500, 8
        %v541 = vmul.u32.u64.compose %v540, %v539
        %v542 = vextract.low.u32 %v541
        %v543 = vextract.high.u32 %v541
        %v544 = vmul.u32.u64.compose %v540, %v535
        %v545 = vextract.low.u32 %v544
        %v546 = vextract.high.u32 %v544
        %v547 = vmul.u32 %v540, %v531
        %v548 = vadd.s32 %v543, %v545
        %vm549 = vc.u32 %v543, %v545
        %v550 = vadd.s32 %v546, 1
        %v551 = vsel %vm549, %v550, %v546
        %v552 = vadd.s32 %v547, %v551
        %v553 = vadd.s32 %v552, 536870912
        %v554 = vshrl.u32 %v553, 30
        %v555 = vshll.u32 %v554, 30
        %v556 = vsub.s32 %v552, %v555
        %vm557 = vcmp.lt.s32.totalorder %v556, 0
        %v558 = vsub.s32 0, %v556
        %v559 = vsel %vm557, %v558, %v556
        %v560 = vclz %v559
        %v561 = vsub.s32 %v560, 2
        %vm562 = vcmp.gt.s32.totalorder 0, %v561
        %v563 = vsel %vm562, 0, %v561
        %v564 = vsub.s32 32, %v563
        %v565 = vshll.u32 %v556, %v563
        %v566 = vshrl.u32 %v548, %v564
        %v567 = vor.u32 %v565, %v566
        %v568 = vsub.s32 4294967266, %v563
        %v569 = vadd.s32 %v568, 127
        %v570 = vshll.u32 %v569, 23
        %v571 = vor.u32 4788187, %v570
        %v572 = vand.u32 2147483647, %v571
        %v574 = vcvt.s32.f32 %v567
        %v575 = vmul.f32 %v574, %v572
        %v576 = vxor.u32 %v575, 2147483648
        %v577 = vsel %vm494, %v576, %v575
        %v578 = vsub.s32 4, %v554
        %v579 = vsel %vm494, %v578, %v554
        %v580 = vsel %vm493, %v380, %v577
        %v581 = vsel %vm493, 0, %v579
        %v582 = vcosq.f32.pop %v580
        %v583 = vsinq.f32.pop %v580
        %vm584 = vweird.f32 %v380
        %v585 = vadd.s32 %v581, 3
        %v586 = vand.u32 %v585, 3
        %vm587 = vcmp.lt.s32.totalorder %v586, 2
        %vm588 = vcmp.eq.s32.totalorder %v586, 0
        %v589 = vxor.u32 %v583, 2147483648
        %v590 = vsel %vm588, %v582, %v589
        %vm591 = vcmp.eq.s32.totalorder %v586, 2
        %v592 = vxor.u32 %v582, 2147483648
        %v593 = vsel %vm591, %v592, %v583
        %v594 = vsel %vm587, %v590, %v593
        %v595 = vsel %vm584, nan, %v594
        %v596 = vand.u32 2147483647, %v384
        %vm597 = vcmp.le.f32.partialorder %v596, 0.7853982
        %vm598 = vcmp.lt.s32.totalorder %v384, 0
        %v599 = vand.u32 %v384, 2139095040
        %v600 = vshrl.u32 %v599, 23
        %v601 = vsub.s32 %v600, 127
        %v602 = vand.u32 2147483647, %v384
        %v603 = vand.u32 %v602, 8388607
        %v604 = vor.u32 %v603, 8388608
        %v605 = vsub.s32 0, %v604
        %v606 = vadd.s32 %v601, 1
        %vm607 = vcmp.gt.s32.totalorder %v606, 0
        %v608 = vsel %vm607, %v606, 0
        %v609 = vshrl.u32 %v608, 5
        %v610 = vand.u32 %v608, 31
        %v611 = vsub.s32 32, %v610
        %v612 = vshrl.u32 683565275, %v611
        %v613 = vshll.u32 683565275, %v610
        %v614 = vshrl.u32 2475754826, %v611
        %v615 = vor.u32 %v613, %v614
        %v616 = vshll.u32 2475754826, %v610
        %v617 = vshrl.u32 2131351028, %v611
        %v618 = vor.u32 %v616, %v617
        %v619 = vshll.u32 2131351028, %v610
        %v620 = vshrl.u32 2102212464, %v611
        %v621 = vor.u32 %v619, %v620
        %v622 = vshll.u32 2102212464, %v610
        %v623 = vshrl.u32 920167782, %v611
        %v624 = vor.u32 %v622, %v623
        %v625 = vshll.u32 920167782, %v610
        %v626 = vshrl.u32 1326507024, %v611
        %v627 = vor.u32 %v625, %v626
        %vm628 = vcmp.lt.s32.totalorder %v609, 1
        %vm629 = vcmp.lt.s32.totalorder %v609, 2
        %vm630 = vcmp.lt.s32.totalorder %v609, 3
        %vm631 = vcmp.lt.s32.totalorder %v609, 4
        %v632 = vsel %vm628, %v612, %v615
        %v633 = vsel %vm631, %v621, 2102212464
        %v634 = vsel %vm630, %v618, %v633
        %v635 = vsel %vm629, %v632, %v634
        %v636 = vsel %vm628, %v615, %v618
        %v637 = vsel %vm631, %v624, 920167782
        %v638 = vsel %vm630, %v621, %v637
        %v639 = vsel %vm629, %v636, %v638
        %v640 = vsel %vm628, %v618, %v621
        %v641 = vsel %vm631, %v627, 1326507024
        %v642 = vsel %vm630, %v624, %v641
        %v643 = vsel %vm629, %v640, %v642
        %v644 = vshll.u32 %v604, 8
        %v645 = vmul.u32.u64.compose %v644, %v643
        %v646 = vextract.low.u32 %v645
        %v647 = vextract.high.u32 %v645
        %v648 = vmul.u32.u64.compose %v644, %v639
        %v649 = vextract.low.u32 %v648
        %v650 = vextract.high.u32 %v648
        %v651 = vmul.u32 %v644, %v635
        %v652 = vadd.s32 %v647, %v649
        %vm653 = vc.u32 %v647, %v649
        %v654 = vadd.s32 %v650, 1
        %v655 = vsel %vm653, %v654, %v650
        %v656 = vadd.s32 %v651, %v655
        %v657 = vadd.s32 %v656, 536870912
        %v658 = vshrl.u32 %v657, 30
        %v659 = vshll.u32 %v658, 30
        %v660 = vsub.s32 %v656, %v659
        %vm661 = vcmp.lt.s32.totalorder %v660, 0
        %v662 = vsub.s32 0, %v660
        %v663 = vsel %vm661, %v662, %v660
        %v664 = vclz %v663
        %v665 = vsub.s32 %v664, 2
        %vm666 = vcmp.gt.s32.totalorder 0, %v665
        %v667 = vsel %vm666, 0, %v665
        %v668 = vsub.s32 32, %v667
        %v669 = vshll.u32 %v660, %v667
        %v670 = vshrl.u32 %v652, %v668
        %v671 = vor.u32 %v669, %v670
        %v672 = vsub.s32 4294967266, %v667
        %v673 = vadd.s32 %v672, 127
        %v674 = vshll.u32 %v673, 23
        %v675 = vor.u32 4788187, %v674
        %v676 = vand.u32 2147483647, %v675
        %v678 = vcvt.s32.f32 %v671
        %v679 = vmul.f32 %v678, %v676
        %v680 = vxor.u32 %v679, 2147483648
        %v681 = vsel %vm598, %v680, %v679
        %v682 = vsub.s32 4, %v658
        %v683 = vsel %vm598, %v682, %v658
        %v684 = vsel %vm597, %v384, %v681
        %v685 = vsel %vm597, 0, %v683
        %v686 = vcosq.f32.pop %v684
        %v687 = vsinq.f32.pop %v684
        %vm688 = vweird.f32 %v384
        %v689 = vadd.s32 %v685, 3
        %v690 = vand.u32 %v689, 3
        %vm691 = vcmp.lt.s32.totalorder %v690, 2
        %vm692 = vcmp.eq.s32.totalorder %v690, 0
        %v693 = vxor.u32 %v687, 2147483648
        %v694 = vsel %vm692, %v686, %v693
        %vm695 = vcmp.eq.s32.totalorder %v690, 2
        %v696 = vxor.u32 %v686, 2147483648
        %v697 = vsel %vm695, %v696, %v687
        %v698 = vsel %vm691, %v694, %v697
        %v699 = vsel %vm688, nan, %v698
        %v700 = vand.u32 2147483647, %v386
        %vm701 = vcmp.le.f32.partialorder %v700, 0.7853982
        %vm702 = vcmp.lt.s32.totalorder %v386, 0
        %v703 = vand.u32 %v386, 2139095040
        %v704 = vshrl.u32 %v703, 23
        %v705 = vsub.s32 %v704, 127
        %v706 = vand.u32 2147483647, %v386
        %v707 = vand.u32 %v706, 8388607
        %v708 = vor.u32 %v707, 8388608
        %v709 = vsub.s32 0, %v708
        %v710 = vadd.s32 %v705, 1
        %vm711 = vcmp.gt.s32.totalorder %v710, 0
        %v712 = vsel %vm711, %v710, 0
        %v713 = vshrl.u32 %v712, 5
        %v714 = vand.u32 %v712, 31
        %v715 = vsub.s32 32, %v714
        %v716 = vshrl.u32 683565275, %v715
        %v717 = vshll.u32 683565275, %v714
        %v718 = vshrl.u32 2475754826, %v715
        %v719 = vor.u32 %v717, %v718
        %v720 = vshll.u32 2475754826, %v714
        %v721 = vshrl.u32 2131351028, %v715
        %v722 = vor.u32 %v720, %v721
        %v723 = vshll.u32 2131351028, %v714
        %v724 = vshrl.u32 2102212464, %v715
        %v725 = vor.u32 %v723, %v724
        %v726 = vshll.u32 2102212464, %v714
        %v727 = vshrl.u32 920167782, %v715
        %v728 = vor.u32 %v726, %v727
        %v729 = vshll.u32 920167782, %v714
        %v730 = vshrl.u32 1326507024, %v715
        %v731 = vor.u32 %v729, %v730
        %vm732 = vcmp.lt.s32.totalorder %v713, 1
        %vm733 = vcmp.lt.s32.totalorder %v713, 2
        %vm734 = vcmp.lt.s32.totalorder %v713, 3
        %vm735 = vcmp.lt.s32.totalorder %v713, 4
        %v736 = vsel %vm732, %v716, %v719
        %v737 = vsel %vm735, %v725, 2102212464
        %v738 = vsel %vm734, %v722, %v737
        %v739 = vsel %vm733, %v736, %v738
        %v740 = vsel %vm732, %v719, %v722
        %v741 = vsel %vm735, %v728, 920167782
        %v742 = vsel %vm734, %v725, %v741
        %v743 = vsel %vm733, %v740, %v742
        %v744 = vsel %vm732, %v722, %v725
        %v745 = vsel %vm735, %v731, 1326507024
        %v746 = vsel %vm734, %v728, %v745
        %v747 = vsel %vm733, %v744, %v746
        %v748 = vshll.u32 %v708, 8
        %v749 = vmul.u32.u64.compose %v748, %v747
        %v750 = vextract.low.u32 %v749
        %v751 = vextract.high.u32 %v749
        %v752 = vmul.u32.u64.compose %v748, %v743
        %v753 = vextract.low.u32 %v752
        %v754 = vextract.high.u32 %v752
        %v755 = vmul.u32 %v748, %v739
        %v756 = vadd.s32 %v751, %v753
        %vm757 = vc.u32 %v751, %v753
        %v758 = vadd.s32 %v754, 1
        %v759 = vsel %vm757, %v758, %v754
        %v760 = vadd.s32 %v755, %v759
        %v761 = vadd.s32 %v760, 536870912
        %v762 = vshrl.u32 %v761, 30
        %v763 = vshll.u32 %v762, 30
        %v764 = vsub.s32 %v760, %v763
        %vm765 = vcmp.lt.s32.totalorder %v764, 0
        %v766 = vsub.s32 0, %v764
        %v767 = vsel %vm765, %v766, %v764
        %v768 = vclz %v767
        %v769 = vsub.s32 %v768, 2
        %vm770 = vcmp.gt.s32.totalorder 0, %v769
        %v771 = vsel %vm770, 0, %v769
        %v772 = vsub.s32 32, %v771
        %v773 = vshll.u32 %v764, %v771
        %v774 = vshrl.u32 %v756, %v772
        %v775 = vor.u32 %v773, %v774
        %v776 = vsub.s32 4294967266, %v771
        %v777 = vadd.s32 %v776, 127
        %v778 = vshll.u32 %v777, 23
        %v779 = vor.u32 4788187, %v778
        %v780 = vand.u32 2147483647, %v779
        %v782 = vcvt.s32.f32 %v775
        %v783 = vmul.f32 %v782, %v780
        %v784 = vxor.u32 %v783, 2147483648
        %v785 = vsel %vm702, %v784, %v783
        %v786 = vsub.s32 4, %v762
        %v787 = vsel %vm702, %v786, %v762
        %v788 = vsel %vm701, %v386, %v785
        %v789 = vsel %vm701, 0, %v787
        %v790 = vcosq.f32.pop %v788
        %v791 = vsinq.f32.pop %v788
        %vm792 = vweird.f32 %v386
        %v793 = vadd.s32 %v789, 3
        %v794 = vand.u32 %v793, 3
        %vm795 = vcmp.lt.s32.totalorder %v794, 2
        %vm796 = vcmp.eq.s32.totalorder %v794, 0
        %v797 = vxor.u32 %v791, 2147483648
        %v798 = vsel %vm796, %v790, %v797
        %vm799 = vcmp.eq.s32.totalorder %v794, 2
        %v800 = vxor.u32 %v790, 2147483648
        %v801 = vsel %vm799, %v800, %v791
        %v802 = vsel %vm795, %v798, %v801
        %v803 = vsel %vm792, nan, %v802
        %v804 = vld [vmem:[#allocation7] sm:$0xff]
        %v805 = vld [vmem:[#allocation7 + $0x8] sm:$0xff]
        %v806 = vld [vmem:[#allocation7 + $0x10] sm:$0xff]
        %v807 = vld [vmem:[#allocation7 + $0x18] sm:$0xff]
        %v808 = vld [vmem:[#allocation7 + $0x20] sm:$0xff]
        %v809 = vld [vmem:[#allocation7 + $0x28] sm:$0xff]
        %v810 = vld [vmem:[#allocation7 + $0x30] sm:$0xff]
        %v811 = vld [vmem:[#allocation7 + $0x38] sm:$0xff]
        %v812 = vld [vmem:[#allocation7 + $0x40] sm:$0xff]
        %v813 = vld [vmem:[#allocation7 + $0x48] sm:$0xff]
        %v814 = vld [vmem:[#allocation7 + $0x50] sm:$0xff]
        %v815 = vld [vmem:[#allocation7 + $0x58] sm:$0xff]
        %v816 = vld [vmem:[#allocation7 + $0x60] sm:$0xff]
        %v817 = vld [vmem:[#allocation7 + $0x68] sm:$0xff]
        %v818 = vld [vmem:[#allocation7 + $0x70] sm:$0xff]
        %v819 = vld [vmem:[#allocation7 + $0x78] sm:$0xff]
        %v820 = vld [vmem:[#allocation7 + $0x80] sm:$0xff]
        %v821 = vld [vmem:[#allocation7 + $0x88] sm:$0xff]
        %v822 = vld [vmem:[#allocation7 + $0x90] sm:$0xff]
        %v823 = vld [vmem:[#allocation7 + $0x98] sm:$0xff]
        %v824 = vld [vmem:[#allocation7 + $0xa0] sm:$0xff]
        %v825 = vld [vmem:[#allocation7 + $0xa8] sm:$0xff]
        %v826 = vld [vmem:[#allocation7 + $0xb0] sm:$0xff]
        %v827 = vld [vmem:[#allocation7 + $0xb8] sm:$0xff]
        %v828 = vld [vmem:[#allocation7 + $0xc0] sm:$0xff]
        %v829 = vld [vmem:[#allocation7 + $0xc8] sm:$0xff]
        %v830 = vld [vmem:[#allocation7 + $0xd0] sm:$0xff]
        %v831 = vld [vmem:[#allocation7 + $0xd8] sm:$0xff]
        %v832 = vld [vmem:[#allocation7 + $0xe0] sm:$0xff]
        %v833 = vld [vmem:[#allocation7 + $0xe8] sm:$0xff]
        %v834 = vld [vmem:[#allocation7 + $0xf0] sm:$0xff]
        %v835 = vld [vmem:[#allocation7 + $0xf8] sm:$0xff]
        %v836 = vld [vmem:[#allocation7 + $0x100] sm:$0xff]
        %v837 = vld [vmem:[#allocation7 + $0x108] sm:$0xff]
        %v838 = vld [vmem:[#allocation7 + $0x110] sm:$0xff]
        %v839 = vld [vmem:[#allocation7 + $0x118] sm:$0xff]
        %v840 = vld [vmem:[#allocation7 + $0x120] sm:$0xff]
        %v841 = vld [vmem:[#allocation7 + $0x128] sm:$0xff]
        %v842 = vld [vmem:[#allocation7 + $0x130] sm:$0xff]
        %v843 = vld [vmem:[#allocation7 + $0x138] sm:$0xff]
        %v844 = vld [vmem:[#allocation7 + $0x140] sm:$0xff]
        %v845 = vld [vmem:[#allocation7 + $0x148] sm:$0xff]
        %v846 = vld [vmem:[#allocation7 + $0x150] sm:$0xff]
        %v847 = vld [vmem:[#allocation7 + $0x158] sm:$0xff]
        %v848 = vld [vmem:[#allocation7 + $0x160] sm:$0xff]
        %v849 = vld [vmem:[#allocation7 + $0x168] sm:$0xff]
        %v850 = vld [vmem:[#allocation7 + $0x170] sm:$0xff]
        %v851 = vld [vmem:[#allocation7 + $0x178] sm:$0xff]
        %v852 = vld [vmem:[#allocation7 + $0x180] sm:$0xff]
        %v853 = vld [vmem:[#allocation7 + $0x188] sm:$0xff]
        %v854 = vld [vmem:[#allocation7 + $0x190] sm:$0xff]
        %v855 = vld [vmem:[#allocation7 + $0x198] sm:$0xff]
        %v856 = vld [vmem:[#allocation7 + $0x1a0] sm:$0xff]
        %v857 = vld [vmem:[#allocation7 + $0x1a8] sm:$0xff]
        %v858 = vld [vmem:[#allocation7 + $0x1b0] sm:$0xff]
        %v859 = vld [vmem:[#allocation7 + $0x1b8] sm:$0xff]
        %v860 = vld [vmem:[#allocation7 + $0x1c0] sm:$0xff]
        %v861 = vld [vmem:[#allocation7 + $0x1c8] sm:$0xff]
        %v862 = vld [vmem:[#allocation7 + $0x1d0] sm:$0xff]
        %v863 = vld [vmem:[#allocation7 + $0x1d8] sm:$0xff]
        %v864 = vld [vmem:[#allocation7 + $0x1e0] sm:$0xff]
        %v865 = vld [vmem:[#allocation7 + $0x1e8] sm:$0xff]
        %v866 = vld [vmem:[#allocation7 + $0x1f0] sm:$0xff]
        %v867 = vld [vmem:[#allocation7 + $0x1f8] sm:$0xff]
        %868 = vmatprep.subr.mxu0 %v805
        %869 = vmatpush1.msra.mxu0 %v804
        %870 = vmatprep.subr.mxu0 %v807
        %871 = vmatpush1.msra.mxu0 %v806
        %872 = vmatprep.subr.mxu0 %v809
        %873 = vmatpush1.msra.mxu0 %v808
        %874 = vmatprep.subr.mxu0 %v811
        %875 = vmatpush1.msra.mxu0 %v810
        %876 = vmatprep.subr.mxu0 %v813
        %877 = vmatpush1.msra.mxu0 %v812
        %878 = vmatprep.subr.mxu0 %v815
        %879 = vmatpush1.msra.mxu0 %v814
        %880 = vmatprep.subr.mxu0 %v817
        %881 = vmatpush1.msra.mxu0 %v816
        %882 = vmatprep.subr.mxu0 %v819
        %883 = vmatpush1.msra.mxu0 %v818
        %884 = vmatprep.subr.mxu0 %v821
        %885 = vmatpush1.msra.mxu0 %v820
        %886 = vmatprep.subr.mxu0 %v823
        %887 = vmatpush1.msra.mxu0 %v822
        %888 = vmatprep.subr.mxu0 %v825
        %889 = vmatpush1.msra.mxu0 %v824
        %890 = vmatprep.subr.mxu0 %v827
        %891 = vmatpush1.msra.mxu0 %v826
        %892 = vmatprep.subr.mxu0 %v829
        %893 = vmatpush1.msra.mxu0 %v828
        %894 = vmatprep.subr.mxu0 %v831
        %895 = vmatpush1.msra.mxu0 %v830
        %896 = vmatprep.subr.mxu0 %v833
        %897 = vmatpush1.msra.mxu0 %v832
        %898 = vmatprep.subr.mxu0 %v835
        %899 = vmatpush1.msra.mxu0 %v834
        %900 = vmatprep.subr.mxu0 %v837
        %901 = vmatpush1.msra.mxu0 %v836
        %902 = vmatprep.subr.mxu0 %v839
        %903 = vmatpush1.msra.mxu0 %v838
        %904 = vmatprep.subr.mxu0 %v841
        %905 = vmatpush1.msra.mxu0 %v840
        %906 = vmatprep.subr.mxu0 %v843
        %907 = vmatpush1.msra.mxu0 %v842
        %908 = vmatprep.subr.mxu0 %v845
        %909 = vmatpush1.msra.mxu0 %v844
        %910 = vmatprep.subr.mxu0 %v847
        %911 = vmatpush1.msra.mxu0 %v846
        %912 = vmatprep.subr.mxu0 %v849
        %913 = vmatpush1.msra.mxu0 %v848
        %914 = vmatprep.subr.mxu0 %v851
        %915 = vmatpush1.msra.mxu0 %v850
        %916 = vmatprep.subr.mxu0 %v853
        %917 = vmatpush1.msra.mxu0 %v852
        %918 = vmatprep.subr.mxu0 %v855
        %919 = vmatpush1.msra.mxu0 %v854
        %920 = vmatprep.subr.mxu0 %v857
        %921 = vmatpush1.msra.mxu0 %v856
        %922 = vmatprep.subr.mxu0 %v859
        %923 = vmatpush1.msra.mxu0 %v858
        %924 = vmatprep.subr.mxu0 %v861
        %925 = vmatpush1.msra.mxu0 %v860
        %926 = vmatprep.subr.mxu0 %v863
        %927 = vmatpush1.msra.mxu0 %v862
        %928 = vmatprep.subr.mxu0 %v865
        %929 = vmatpush1.msra.mxu0 %v864
        %930 = vmatprep.subr.mxu0 %v867
        %931 = vmatpush1.msra.mxu0 %v866
        %932 = vmatprep.mubr.f32.mxu0 %v595
        %933 = vmatmul.mubr.f32.gmra.mrb[0].mxu0 %v491
        %v934 = vpop.f32.mrb[0].mxu0
        %v935 = vadd.f32 0.0, %v934
        %v936 = vpop.f32.mrb[0].mxu0
        %v937 = vadd.f32 0.0, %v936
        %938 = vmatprep.mubr.f32.mxu0 %v803
        %939 = vmatmul.mubr.f32.gmra.mrb[0].mxu0 %v699
        %v940 = vpop.f32.mrb[0].mxu0
        %v941 = vadd.f32 0.0, %v940
        %v942 = vpop.f32.mrb[0].mxu0
        %v943 = vadd.f32 0.0, %v942
        %944 = vdwg.mxu0
        %v945 = vld [vmem:[%s4] sm:$0x1]
        %v947 = vlaneseq
        %v948 = vshrl.u32 %v947, 7
        %v949 = vsub.s32 0, %v948
        %v950 = vrot.slane %v945, %v949
        %v952 = vadd.f32 %v935, %v950
        %v953 = vadd.f32 %v941, %v950
        %v954 = vand.u32 2147483647, %v952
        %vm955 = vcmp.le.f32.partialorder %v954, 0.7853982
        %vm956 = vcmp.lt.s32.totalorder %v952, 0
        %v957 = vand.u32 %v952, 2139095040
        %v958 = vshrl.u32 %v957, 23
        %v959 = vsub.s32 %v958, 127
        %v960 = vand.u32 2147483647, %v952
        %v961 = vand.u32 %v960, 8388607
        %v962 = vor.u32 %v961, 8388608
        %v963 = vsub.s32 0, %v962
        %v964 = vadd.s32 %v959, 1
        %vm965 = vcmp.gt.s32.totalorder %v964, 0
        %v966 = vsel %vm965, %v964, 0
        %v967 = vshrl.u32 %v966, 5
        %v968 = vand.u32 %v966, 31
        %v969 = vsub.s32 32, %v968
        %v970 = vshrl.u32 683565275, %v969
        %v971 = vshll.u32 683565275, %v968
        %v972 = vshrl.u32 2475754826, %v969
        %v973 = vor.u32 %v971, %v972
        %v974 = vshll.u32 2475754826, %v968
        %v975 = vshrl.u32 2131351028, %v969
        %v976 = vor.u32 %v974, %v975
        %v977 = vshll.u32 2131351028, %v968
        %v978 = vshrl.u32 2102212464, %v969
        %v979 = vor.u32 %v977, %v978
        %v980 = vshll.u32 2102212464, %v968
        %v981 = vshrl.u32 920167782, %v969
        %v982 = vor.u32 %v980, %v981
        %v983 = vshll.u32 920167782, %v968
        %v984 = vshrl.u32 1326507024, %v969
        %v985 = vor.u32 %v983, %v984
        %vm986 = vcmp.lt.s32.totalorder %v967, 1
        %vm987 = vcmp.lt.s32.totalorder %v967, 2
        %vm988 = vcmp.lt.s32.totalorder %v967, 3
        %vm989 = vcmp.lt.s32.totalorder %v967, 4
        %v990 = vsel %vm986, %v970, %v973
        %v991 = vsel %vm989, %v979, 2102212464
        %v992 = vsel %vm988, %v976, %v991
        %v993 = vsel %vm987, %v990, %v992
        %v994 = vsel %vm986, %v973, %v976
        %v995 = vsel %vm989, %v982, 920167782
        %v996 = vsel %vm988, %v979, %v995
        %v997 = vsel %vm987, %v994, %v996
        %v998 = vsel %vm986, %v976, %v979
        %v999 = vsel %vm989, %v985, 1326507024
        %v1000 = vsel %vm988, %v982, %v999
        %v1001 = vsel %vm987, %v998, %v1000
        %v1002 = vshll.u32 %v962, 8
        %v1003 = vmul.u32.u64.compose %v1002, %v1001
        %v1004 = vextract.low.u32 %v1003
        %v1005 = vextract.high.u32 %v1003
        %v1006 = vmul.u32.u64.compose %v1002, %v997
        %v1007 = vextract.low.u32 %v1006
        %v1008 = vextract.high.u32 %v1006
        %v1009 = vmul.u32 %v1002, %v993
        %v1010 = vadd.s32 %v1005, %v1007
        %vm1011 = vc.u32 %v1005, %v1007
        %v1012 = vadd.s32 %v1008, 1
        %v1013 = vsel %vm1011, %v1012, %v1008
        %v1014 = vadd.s32 %v1009, %v1013
        %v1015 = vadd.s32 %v1014, 536870912
        %v1016 = vshrl.u32 %v1015, 30
        %v1017 = vshll.u32 %v1016, 30
        %v1018 = vsub.s32 %v1014, %v1017
        %vm1019 = vcmp.lt.s32.totalorder %v1018, 0
        %v1020 = vsub.s32 0, %v1018
        %v1021 = vsel %vm1019, %v1020, %v1018
        %v1022 = vclz %v1021
        %v1023 = vsub.s32 %v1022, 2
        %vm1024 = vcmp.gt.s32.totalorder 0, %v1023
        %v1025 = vsel %vm1024, 0, %v1023
        %v1026 = vsub.s32 32, %v1025
        %v1027 = vshll.u32 %v1018, %v1025
        %v1028 = vshrl.u32 %v1010, %v1026
        %v1029 = vor.u32 %v1027, %v1028
        %v1030 = vsub.s32 4294967266, %v1025
        %v1031 = vadd.s32 %v1030, 127
        %v1032 = vshll.u32 %v1031, 23
        %v1033 = vor.u32 4788187, %v1032
        %v1034 = vand.u32 2147483647, %v1033
        %v1036 = vcvt.s32.f32 %v1029
        %v1037 = vmul.f32 %v1036, %v1034
        %v1038 = vxor.u32 %v1037, 2147483648
        %v1039 = vsel %vm956, %v1038, %v1037
        %v1040 = vsub.s32 4, %v1016
        %v1041 = vsel %vm956, %v1040, %v1016
        %v1042 = vsel %vm955, %v952, %v1039
        %v1043 = vsel %vm955, 0, %v1041
        %v1044 = vcosq.f32.pop %v1042
        %v1045 = vsinq.f32.pop %v1042
        %vm1046 = vweird.f32 %v952
        %v1047 = vadd.s32 %v1043, 3
        %v1048 = vand.u32 %v1047, 3
        %vm1049 = vcmp.lt.s32.totalorder %v1048, 2
        %vm1050 = vcmp.eq.s32.totalorder %v1048, 0
        %v1051 = vxor.u32 %v1045, 2147483648
        %v1052 = vsel %vm1050, %v1044, %v1051
        %vm1053 = vcmp.eq.s32.totalorder %v1048, 2
        %v1054 = vxor.u32 %v1044, 2147483648
        %v1055 = vsel %vm1053, %v1054, %v1045
        %v1056 = vsel %vm1049, %v1052, %v1055
        %v1057 = vsel %vm1046, nan, %v1056
        %v1058 = vand.u32 2147483647, %v953
        %vm1059 = vcmp.le.f32.partialorder %v1058, 0.7853982
        %vm1060 = vcmp.lt.s32.totalorder %v953, 0
        %v1061 = vand.u32 %v953, 2139095040
        %v1062 = vshrl.u32 %v1061, 23
        %v1063 = vsub.s32 %v1062, 127
        %v1064 = vand.u32 2147483647, %v953
        %v1065 = vand.u32 %v1064, 8388607
        %v1066 = vor.u32 %v1065, 8388608
        %v1067 = vsub.s32 0, %v1066
        %v1068 = vadd.s32 %v1063, 1
        %vm1069 = vcmp.gt.s32.totalorder %v1068, 0
        %v1070 = vsel %vm1069, %v1068, 0
        %v1071 = vshrl.u32 %v1070, 5
        %v1072 = vand.u32 %v1070, 31
        %v1073 = vsub.s32 32, %v1072
        %v1074 = vshrl.u32 683565275, %v1073
        %v1075 = vshll.u32 683565275, %v1072
        %v1076 = vshrl.u32 2475754826, %v1073
        %v1077 = vor.u32 %v1075, %v1076
        %v1078 = vshll.u32 2475754826, %v1072
        %v1079 = vshrl.u32 2131351028, %v1073
        %v1080 = vor.u32 %v1078, %v1079
        %v1081 = vshll.u32 2131351028, %v1072
        %v1082 = vshrl.u32 2102212464, %v1073
        %v1083 = vor.u32 %v1081, %v1082
        %v1084 = vshll.u32 2102212464, %v1072
        %v1085 = vshrl.u32 920167782, %v1073
        %v1086 = vor.u32 %v1084, %v1085
        %v1087 = vshll.u32 920167782, %v1072
        %v1088 = vshrl.u32 1326507024, %v1073
        %v1089 = vor.u32 %v1087, %v1088
        %vm1090 = vcmp.lt.s32.totalorder %v1071, 1
        %vm1091 = vcmp.lt.s32.totalorder %v1071, 2
        %vm1092 = vcmp.lt.s32.totalorder %v1071, 3
        %vm1093 = vcmp.lt.s32.totalorder %v1071, 4
        %v1094 = vsel %vm1090, %v1074, %v1077
        %v1095 = vsel %vm1093, %v1083, 2102212464
        %v1096 = vsel %vm1092, %v1080, %v1095
        %v1097 = vsel %vm1091, %v1094, %v1096
        %v1098 = vsel %vm1090, %v1077, %v1080
        %v1099 = vsel %vm1093, %v1086, 920167782
        %v1100 = vsel %vm1092, %v1083, %v1099
        %v1101 = vsel %vm1091, %v1098, %v1100
        %v1102 = vsel %vm1090, %v1080, %v1083
        %v1103 = vsel %vm1093, %v1089, 1326507024
        %v1104 = vsel %vm1092, %v1086, %v1103
        %v1105 = vsel %vm1091, %v1102, %v1104
        %v1106 = vshll.u32 %v1066, 8
        %v1107 = vmul.u32.u64.compose %v1106, %v1105
        %v1108 = vextract.low.u32 %v1107
        %v1109 = vextract.high.u32 %v1107
        %v1110 = vmul.u32.u64.compose %v1106, %v1101
        %v1111 = vextract.low.u32 %v1110
        %v1112 = vextract.high.u32 %v1110
        %v1113 = vmul.u32 %v1106, %v1097
        %v1114 = vadd.s32 %v1109, %v1111
        %vm1115 = vc.u32 %v1109, %v1111
        %v1116 = vadd.s32 %v1112, 1
        %v1117 = vsel %vm1115, %v1116, %v1112
        %v1118 = vadd.s32 %v1113, %v1117
        %v1119 = vadd.s32 %v1118, 536870912
        %v1120 = vshrl.u32 %v1119, 30
        %v1121 = vshll.u32 %v1120, 30
        %v1122 = vsub.s32 %v1118, %v1121
        %vm1123 = vcmp.lt.s32.totalorder %v1122, 0
        %v1124 = vsub.s32 0, %v1122
        %v1125 = vsel %vm1123, %v1124, %v1122
        %v1126 = vclz %v1125
        %v1127 = vsub.s32 %v1126, 2
        %vm1128 = vcmp.gt.s32.totalorder 0, %v1127
        %v1129 = vsel %vm1128, 0, %v1127
        %v1130 = vsub.s32 32, %v1129
        %v1131 = vshll.u32 %v1122, %v1129
        %v1132 = vshrl.u32 %v1114, %v1130
        %v1133 = vor.u32 %v1131, %v1132
        %v1134 = vsub.s32 4294967266, %v1129
        %v1135 = vadd.s32 %v1134, 127
        %v1136 = vshll.u32 %v1135, 23
        %v1137 = vor.u32 4788187, %v1136
        %v1138 = vand.u32 2147483647, %v1137
        %v1140 = vcvt.s32.f32 %v1133
        %v1141 = vmul.f32 %v1140, %v1138
        %v1142 = vxor.u32 %v1141, 2147483648
        %v1143 = vsel %vm1060, %v1142, %v1141
        %v1144 = vsub.s32 4, %v1120
        %v1145 = vsel %vm1060, %v1144, %v1120
        %v1146 = vsel %vm1059, %v953, %v1143
        %v1147 = vsel %vm1059, 0, %v1145
        %v1148 = vcosq.f32.pop %v1146
        %v1149 = vsinq.f32.pop %v1146
        %vm1150 = vweird.f32 %v953
        %v1151 = vadd.s32 %v1147, 3
        %v1152 = vand.u32 %v1151, 3
        %vm1153 = vcmp.lt.s32.totalorder %v1152, 2
        %vm1154 = vcmp.eq.s32.totalorder %v1152, 0
        %v1155 = vxor.u32 %v1149, 2147483648
        %v1156 = vsel %vm1154, %v1148, %v1155
        %vm1157 = vcmp.eq.s32.totalorder %v1152, 2
        %v1158 = vxor.u32 %v1148, 2147483648
        %v1159 = vsel %vm1157, %v1158, %v1149
        %v1160 = vsel %vm1153, %v1156, %v1159
        %v1161 = vsel %vm1150, nan, %v1160
        %v1162 = vmul.f32 %v1057, 0.5
        %v1163 = vmul.f32 %v1161, 0.5
        %v1164 = vadd.f32 %v1162, %v937
        %v1165 = vadd.f32 %v1163, %v943
        %1166 = vst [vmem:[%s271] sm:$0xff] %v1164
        %1167 = vst [vmem:[%s271 + $0x8] sm:$0xff] %v1165
        %s1168 = sand.u32 %s141, 1
        %s1169 = scalar_lea.sflag [#allocation4], %s1168
        %s1170 = sand.u32 %s141, 1
        %s1171 = smul.addr %s1170, 16
        %s1172 = scalar_lea.vmem [#allocation8], %s1171
        // Predicated region
        $region53: #{tpu_custom_call.1} parent=39 // pred_check
          %p1173 = pneg %p151
        $region54: #{tpu_custom_call.1} parent=39 // pred_check_branch
          %1175 = sbr.rel (%p1173) target = $region56
        $region55: #{tpu_custom_call.1} parent=39 // pred_region
          %s1176 = smul.u32 2, %s23
          %s1178 = ssub.s32 256, 256
          %1179 = vsyncadd %s1169, %s1178
          %s1180 = smul.addr %s1176, 128
          %s1181 = scalar_lea.hbm %s5, %s1180
          %s1182 = sshll.u32 %s1172, 4
          %s1183 = int_to_ptr.vmem [resolvable:$true] %s1182
          %1188 = dma.vmem_to_hbm [thread:$0]  %s1183, 256, %s1181, %s1169, 128, 128, 8
        $region56: #{tpu_custom_call.1} parent=39 // pred_fallthru
          _
      $region40: #{tpu_custom_call.1} parent=5 // pred_fallthru
        _
      %p1189 = scmp.le.s32.totalorder 2, %s18
      // Predicated region
      $region57: #{tpu_custom_call.1} parent=5 // pred_check
        %p1190 = pneg %p1189
      $region58: #{tpu_custom_call.1} parent=5 // pred_check_branch
        %1192 = sbr.rel (%p1190) target = $region60
      $region59: #{tpu_custom_call.1} parent=5 // pred_region
        %s1193 = ssub.s32 %s18, 2
        // Predicated region
        $region61: #{tpu_custom_call.1} parent=59 // pred_check
          %p1194 = pneg %p157
        $region62: #{tpu_custom_call.1} parent=59 // pred_check_branch
          %1196 = sbr.rel (%p1194) target = $region64
        $region63: #{tpu_custom_call.1} parent=59 // pred_region
          %s1197 = sand.u32 %s142, 1
          %s1198 = scalar_lea.sflag [#allocation4], %s1197
          %s1199 = sand.u32 %s142, 1
          %s1200 = smul.addr %s1199, 16
          %s1201 = scalar_lea.vmem [#allocation8], %s1200
          %1202 = dma.done %s1198, 256
        $region64: #{tpu_custom_call.1} parent=59 // pred_fallthru
          _
      $region60: #{tpu_custom_call.1} parent=5 // pred_fallthru
        _
    $region6: #{tpu_custom_call.1} parent=1 // loop_footer
      %s22 = sadd.s32 1, %s18
    $region7: #{tpu_custom_call.1} parent=1 // loop_footer_branch
      %17 = sbr.rel target = $region3
    $region8: #{tpu_custom_call.1} parent=1 // loop_exit
      _
    %1203 = vsyncpa [#allocation3], 1
    %s1204 = scalar_lea.sflag [#allocation3], 1
    %1205 = vsyncpa %s1204, 1
    %1206 = vsyncpa [#allocation6], 1
    %1207 = vsyncpa [#allocation4], 1
    %s1208 = scalar_lea.sflag [#allocation4], 1
    %1209 = vsyncpa %s1208, 1

</llo_original>
